<compile_context>
chip_gen: v7x
topology: tpu7x:2x2x1
jax: 0.10.0
libtpu: 0.0.40
codegen_flags: <defaults>
</compile_context>

<pallas_src>
import functools

import jax
import jax.numpy as jnp
from jax import lax
from jax.experimental import pallas as pl
from jax.experimental.pallas import tpu as pltpu

_LANE = 128


def _round_up(n, m):
    return ((n + m - 1) // m) * m


def _pick_row_tile(n_pad, budget_bytes=12 * 1024 * 1024):
    # Largest of {512, 256, 128} that divides n_pad and keeps one (Tr, n_pad)
    # f32 adjacency block under budget (double-buffered by the pipeline).
    for t in (512, 256):
        if n_pad % t == 0 and t * n_pad * 4 <= budget_bytes:
            return t
    return 128


def _pick_gram_tile(n_pad):
    # Lane-dense output tile, large enough to amortize per-grid-step overhead.
    for t in (512, 256):
        if n_pad % t == 0:
            return t
    return 128


def _vmem_limit(block_bytes, floor=32 * 1024 * 1024, headroom=4 * 1024 * 1024):
    # Every pipelined block is double-buffered; leave headroom for internals.
    return int(max(sum(2 * b for b in block_bytes) + headroom, floor))


def _h_kernel(x_ref, adj_ref, w_ref, b_ref, h_ref, *, matmul_dtype):
    # Refs (batch dim squeezed):
    #   x_ref:   (Np, D)   node features of the current batch (resident per b)
    #   adj_ref: (Tr, Np)  adjacency rows [r*Tr, (r+1)*Tr) of the current batch
    #   w_ref:   (D, D)    GraphConvolution weight (shared across grid)
    #   b_ref:   (1, D)    GraphConvolution bias   (shared across grid)
    #   h_ref:   (Tr, D)   output tile of h = relu((adj @ x) @ W + b)
    adj = adj_ref[...]
    x = x_ref[...]
    if matmul_dtype is not None:
        adj = adj.astype(matmul_dtype)
        x = x.astype(matmul_dtype)
    ax = jnp.dot(adj, x, preferred_element_type=jnp.float32)       # (Tr, D)
    w = w_ref[...]
    if matmul_dtype is not None:
        ax = ax.astype(matmul_dtype)
        w = w.astype(matmul_dtype)
    gc = jnp.dot(ax, w, preferred_element_type=jnp.float32) + b_ref[...]
    # ReLU; dropout is eval-mode identity.
    h_ref[...] = jnp.maximum(gc, 0.0).astype(h_ref.dtype)


def _gram_kernel(hi_ref, hj_ref, o_ref):
    # hi_ref: (Tg, D) rows i, hj_ref: (Tg, D) rows j, o_ref: (Tg, Tg).
    # Contract the last axes of both operands (no materialized transpose).
    o_ref[...] = lax.dot_general(
        hi_ref[...], hj_ref[...],
        dimension_numbers=(((1,), (1,)), ((), ())),
        preferred_element_type=jnp.float32,
    ).astype(o_ref.dtype)


def structure_decoder(x, adj, weight, bias, *, matmul_dtype=None):
    """Pallas forward pass of Structure_Decoder (eval mode).

    x:      (B, N, D) float32
    adj:    (B, N, N) float32
    weight: (D, D)    float32
    bias:   (D,)      float32
    returns (B, N, N) float32
    """
    B, N, D = x.shape
    assert adj.shape == (B, N, N)
    assert weight.shape == (D, D)
    assert bias.shape == (D,)

    x = x.astype(jnp.float32)
    adj = adj.astype(jnp.float32)
    weight = weight.astype(jnp.float32)
    bias2d = bias.reshape(1, D).astype(jnp.float32)

    # Pad N up to a lane-dense multiple of 128.  Padded rows/cols are zero and
    # cannot contaminate the valid (N, N) output block, which we slice out.
    Np = _round_up(N, _LANE)
    if Np != N:
        x = jnp.pad(x, ((0, 0), (0, Np - N), (0, 0)))
        adj = jnp.pad(adj, ((0, 0), (0, Np - N), (0, Np - N)))

    h_dtype = jnp.float32 if matmul_dtype is None else matmul_dtype
    h_bytes = jnp.dtype(h_dtype).itemsize

    # ------- Pass 1: h = relu((adj @ x) @ W + b), adj streamed exactly once.
    Tr = _pick_row_tile(Np)
    vmem_a = _vmem_limit([
        Np * D * 4,          # x slab (re-DMA'd only at batch boundaries)
        Tr * Np * 4,         # adjacency row tile
        D * D * 4 + D * 4,   # weight + bias
        Tr * D * h_bytes,    # h output tile
    ])
    h = pl.pallas_call(
        functools.partial(_h_kernel, matmul_dtype=matmul_dtype),
        out_shape=jax.ShapeDtypeStruct((B, Np, D), h_dtype),
        grid_spec=pltpu.PrefetchScalarGridSpec(
            num_scalar_prefetch=0,
            grid=(B, Np // Tr),
            in_specs=[
                pl.BlockSpec((pl.Squeezed(), Np, D), lambda b, r: (b, 0, 0)),
                pl.BlockSpec((pl.Squeezed(), Tr, Np), lambda b, r: (b, r, 0)),
                pl.BlockSpec((D, D), lambda b, r: (0, 0)),
                pl.BlockSpec((1, D), lambda b, r: (0, 0)),
            ],
            out_specs=pl.BlockSpec((pl.Squeezed(), Tr, D),
                                   lambda b, r: (b, r, 0)),
        ),
        compiler_params=pltpu.CompilerParams(
            dimension_semantics=("parallel", "parallel"),
            vmem_limit_bytes=vmem_a,
        ),
    )(x, adj, weight, bias2d)

    # ------- Pass 2: out = h @ h^T, (Tg, Tg) output tiles.
    Tg = _pick_gram_tile(Np)
    vmem_b = _vmem_limit([
        Tg * D * h_bytes,    # h row tile i
        Tg * D * h_bytes,    # h row tile j
        Tg * Tg * 4,         # output tile
    ])
    out = pl.pallas_call(
        _gram_kernel,
        out_shape=jax.ShapeDtypeStruct((B, Np, Np), jnp.float32),
        grid_spec=pltpu.PrefetchScalarGridSpec(
            num_scalar_prefetch=0,
            grid=(B, Np // Tg, Np // Tg),
            in_specs=[
                # Row tile i: index only changes with i -> not re-DMA'd per j.
                pl.BlockSpec((pl.Squeezed(), Tg, D), lambda b, i, j: (b, i, 0)),
                # Row tile j: small (Tg*D) fetch per step.
                pl.BlockSpec((pl.Squeezed(), Tg, D), lambda b, i, j: (b, j, 0)),
            ],
            out_specs=pl.BlockSpec((pl.Squeezed(), Tg, Tg),
                                   lambda b, i, j: (b, i, j)),
        ),
        compiler_params=pltpu.CompilerParams(
            dimension_semantics=("parallel", "parallel", "parallel"),
            vmem_limit_bytes=vmem_b,
        ),
    )(h, h)

    if Np != N:
        out = out[:, :N, :N]
    return out


def reference(x, adj, weight, bias):
    support = jnp.einsum("bnd,de->bne", x, weight)
    h = jax.nn.relu(jnp.einsum("bnm,bme->bne", adj, support) + bias)
    return jnp.einsum("bnd,bmd->bnm", h, h)


if __name__ == "__main__":
    B, N, nhid = 2, 16, 32

    key = jax.random.PRNGKey(0)
    kx, kadj, kw, kb = jax.random.split(key, 4)

    x = jax.random.normal(kx, (B, N, nhid), dtype=jnp.float32)

    # Symmetric row-normalized adjacency (deterministic).
    a_raw = jax.random.uniform(kadj, (B, N, N), dtype=jnp.float32)
    a_sym = 0.5 * (a_raw + jnp.transpose(a_raw, (0, 2, 1))) + jnp.eye(N)[None]
    adj = a_sym / jnp.sum(a_sym, axis=-1, keepdims=True)

    # GraphConvolution params: uniform(-1/sqrt(nhid), 1/sqrt(nhid)), like pygcn.
    stdv = 1.0 / jnp.sqrt(jnp.float32(nhid))
    weight = jax.random.uniform(kw, (nhid, nhid), jnp.float32, -stdv, stdv)
    bias = jax.random.uniform(kb, (nhid,), jnp.float32, -stdv, stdv)

    out = structure_decoder(x, adj, weight, bias)
    out = jax.block_until_ready(out)

    ref = reference(x, adj, weight, bias)
    assert out.shape == (B, N, N)
    assert jnp.allclose(out, ref, atol=1e-4, rtol=1e-4), "mismatch vs reference"

    print("KERNEL_OK")
</pallas_src>

<mosaic_0001>
module attributes {stable_mosaic.version = 11 : i64} {
  func.func @_h_kernel(%arg0: i32, %arg1: i32, %arg2: memref<1x128x32xf32, #tpu.memory_space<vmem>>, %arg3: memref<1x128x128xf32, #tpu.memory_space<vmem>>, %arg4: memref<32x32xf32, #tpu.memory_space<vmem>>, %arg5: memref<1x32xf32, #tpu.memory_space<vmem>>, %arg6: memref<1x128x32xf32, #tpu.memory_space<vmem>>) attributes {dimension_semantics = [#tpu.dimension_semantics<parallel>, #tpu.dimension_semantics<parallel>], iteration_bounds = array<i64: 2, 1>, scalar_prefetch = 0 : i64, scratch_operands = 0 : i64, tpu.core_type = #tpu.core_type<tc>, window_params = [{transform_indices = @transform_0, window_bounds = array<i64: 1, 128, 32>}, {transform_indices = @transform_1, window_bounds = array<i64: 1, 128, 128>}, {pipeline_mode = #tpu.pipeline_mode<synchronous>, transform_indices = @transform_2, window_bounds = array<i64: 32, 32>}, {pipeline_mode = #tpu.pipeline_mode<synchronous>, transform_indices = @transform_3, window_bounds = array<i64: 1, 32>}, {transform_indices = @transform_4, window_bounds = array<i64: 1, 128, 32>}]} {
    %c0 = arith.constant 0 : index
    %c0_0 = arith.constant 0 : index
    %c0_1 = arith.constant 0 : index
    %0 = vector.load %arg3[%c0, %c0_0, %c0_1] : memref<1x128x128xf32, #tpu.memory_space<vmem>>, vector<1x128x128xf32>
    %1 = vector.shape_cast %0 : vector<1x128x128xf32> to vector<128x128xf32>
    %c0_2 = arith.constant 0 : index
    %c0_3 = arith.constant 0 : index
    %c0_4 = arith.constant 0 : index
    %2 = vector.load %arg2[%c0_2, %c0_3, %c0_4] : memref<1x128x32xf32, #tpu.memory_space<vmem>>, vector<1x128x32xf32>
    %3 = vector.shape_cast %2 : vector<1x128x32xf32> to vector<128x32xf32>
    %cst = arith.constant dense<0.000000e+00> : vector<128x32xf32>
    %4 = tpu.matmul %1, %3, %cst {dimension_numbers = #tpu.dot_dimension_numbers<[1], [0], [0], [1], [0, 0, 1, 1], [], []>} : vector<128x128xf32>, vector<128x32xf32>, vector<128x32xf32> -> vector<128x32xf32>
    %c0_5 = arith.constant 0 : index
    %c0_6 = arith.constant 0 : index
    %5 = vector.load %arg4[%c0_5, %c0_6] : memref<32x32xf32, #tpu.memory_space<vmem>>, vector<32x32xf32>
    %cst_7 = arith.constant dense<0.000000e+00> : vector<128x32xf32>
    %6 = tpu.matmul %4, %5, %cst_7 {dimension_numbers = #tpu.dot_dimension_numbers<[1], [0], [0], [1], [0, 0, 1, 1], [], []>} : vector<128x32xf32>, vector<32x32xf32>, vector<128x32xf32> -> vector<128x32xf32>
    %c0_8 = arith.constant 0 : index
    %c0_9 = arith.constant 0 : index
    %7 = vector.load %arg5[%c0_8, %c0_9] : memref<1x32xf32, #tpu.memory_space<vmem>>, vector<1x32xf32>
    %8 = vector.broadcast %7 : vector<1x32xf32> to vector<128x32xf32>
    %9 = arith.addf %6, %8 : vector<128x32xf32>
    %cst_10 = arith.constant 0.000000e+00 : f32
    %10 = vector.broadcast %cst_10 : f32 to vector<128x32xf32>
    %11 = arith.maximumf %9, %10 : vector<128x32xf32>
    %c0_11 = arith.constant 0 : index
    %c0_12 = arith.constant 0 : index
    %c0_13 = arith.constant 0 : index
    %12 = vector.load %arg6[%c0_11, %c0_12, %c0_13] : memref<1x128x32xf32, #tpu.memory_space<vmem>>, vector<1x128x32xf32>
    %13 = vector.shape_cast %12 : vector<1x128x32xf32> to vector<128x32xf32>
    %14 = vector.shape_cast %11 : vector<128x32xf32> to vector<1x128x32xf32>
    tpu.vector_store %arg6[%c0_11, %c0_12, %c0_13], %14 {strides = array<i32>} : memref<1x128x32xf32, #tpu.memory_space<vmem>>, vector<1x128x32xf32>,
    return
  }
  func.func @transform_0(%arg0: i32, %arg1: i32) -> (i32, i32, i32) {
    %c0_i32 = arith.constant 0 : i32
    %c0_i32_0 = arith.constant 0 : i32
    %c0_i32_1 = arith.constant 0 : i32
    return %arg0, %c0_i32, %c0_i32_0 : i32, i32, i32
  }
  func.func @transform_1(%arg0: i32, %arg1: i32) -> (i32, i32, i32) {
    %c0_i32 = arith.constant 0 : i32
    %c0_i32_0 = arith.constant 0 : i32
    return %arg0, %arg1, %c0_i32 : i32, i32, i32
  }
  func.func @transform_2(%arg0: i32, %arg1: i32) -> (i32, i32) {
    %c0_i32 = arith.constant 0 : i32
    %c0_i32_0 = arith.constant 0 : i32
    %c0_i32_1 = arith.constant 0 : i32
    return %c0_i32, %c0_i32_0 : i32, i32
  }
  func.func @transform_3(%arg0: i32, %arg1: i32) -> (i32, i32) {
    %c0_i32 = arith.constant 0 : i32
    %c0_i32_0 = arith.constant 0 : i32
    %c0_i32_1 = arith.constant 0 : i32
    return %c0_i32, %c0_i32_0 : i32, i32
  }
  func.func @transform_4(%arg0: i32, %arg1: i32) -> (i32, i32, i32) {
    %c0_i32 = arith.constant 0 : i32
    %c0_i32_0 = arith.constant 0 : i32
    return %arg0, %arg1, %c0_i32 : i32, i32, i32
  }
}

</mosaic_0001>

<llo_original>
// kernel: tpu_custom_call.1
$region0: #{tpu_custom_call.1}
  #allocation0 [shape = 'u32[]', space=smem, size = 0x4, offset = 0x4, fixed_abs, tag = 'smem constant byte address 0x4 - core index']
  #allocation1 [shape = 'u32[144,128]{1,0:T(1,128)}', space=vmem, size = 0x12000, scoped, tag = 'internal scratch']
  %s0 = inlined_call_operand.vmem [shape: f32[2,128,32], index: 0, kind: input, shape index: {}]
  %s1 = inlined_call_operand.vmem [shape: f32[2,128,128], index: 1, kind: input, shape index: {}]
  %s2 = inlined_call_operand.vmem [shape: f32[32,32], index: 2, kind: input, shape index: {}]
  %s3 = inlined_call_operand.vmem [shape: f32[1,32], index: 3, kind: input, shape index: {}]
  %s4 = inlined_call_operand.vmem [shape: f32[2,128,32], index: 4, kind: output, shape index: {}]
  %s5 = sld [smem:[#allocation0]]
  $region49: #{tpu_custom_call.1} parent=0
    _
  %s7 = ssub.s32 1, %s5
  %s8 = scalar_select 0, %s7, %s5
  loop: start=0, step=1, limit=4
  $region2: #{tpu_custom_call.1} parent=0 // loop_pre_header
    _
  $region3: #{tpu_custom_call.1} parent=0 // loop_header
    %s10 = sphi 0, %s14
    %p11 = scmp.ge.s32.totalorder %s10, 4
    %s17 = sphi 0, %s29
    %s18 = sphi 0, %s25
    %s19 = sphi 0, %s17
    %s20 = sphi 0, %s18
    %s21 = sphi 0, %s19
    %s22 = sphi 0, %s20
    %s32 = sphi 0, %s34
    %s35 = sphi 0, %s32
    %s36 = sphi 0, %s35
    %s52 = sphi 0, %s36
    %s60 = sphi 0, %s62
    %s63 = sphi 0, %s60
    %s64 = sphi 0, %s63
    %s80 = sphi 0, %s64
    %s84 = sphi 0, %s84
    %s86 = sphi 0, %s84
    %s87 = sphi 0, %s86
    %s101 = sphi 0, %s87
    %s105 = sphi 0, %s105
    %s107 = sphi 0, %s105
    %s108 = sphi 0, %s107
    %s122 = sphi 0, %s108
    %s130 = sphi 0, %s132
    %s133 = sphi 0, %s130
    %s134 = sphi 0, %s133
    %s150 = sphi 0, %s134
  $region4: #{tpu_custom_call.1} parent=0 // loop_header_branch
    %13 = sbr.rel (%p11) target = $region8
  $region5: #{tpu_custom_call.1} parent=0 // loop_body
    %s15 = ssub.s32 %s10, 1
    %s16 = ssub.s32 %s10, 2
    %s23 = sadd.s32 1, %s18
    %p24 = scmp.ge.s32.totalorder %s23, 1
    %s25 = scalar_select %p24, 0, %s23
    %s26 = sadd.s32 1, %s17
    %s27 = scalar_select %p24, %s26, %s17
    %p28 = scmp.ge.s32.totalorder %s27, 2
    %s29 = scalar_select %p28, 0, %s27
    %s30 = ssub.s32 %s17, %s29
    %p31 = scmp.eq.s32.totalorder %s30, 0
    %s33 = sadd.s32 %s32, 1
    %s34 = scalar_select %p31, %s32, %s33
    %p37 = pneg %p31
    %p38 = scmp.eq.s32.totalorder %s10, 1
    %p39 = por %p37, %p38
    %p40 = scmp.ne.s32.totalorder %s32, %s35
    %p41 = scmp.eq.s32.totalorder %s10, 0
    %p42 = por %p40, %p41
    %p43 = scmp.ne.s32.totalorder %s32, %s35
    %p44 = scmp.eq.s32.totalorder %s15, 1
    %p45 = por %p43, %p44
    %p46 = scmp.ne.s32.totalorder %s35, %s36
    %p47 = scmp.eq.s32.totalorder %s15, 0
    %p48 = por %p46, %p47
    %p49 = scmp.ne.s32.totalorder %s35, %s36
    %p50 = scmp.eq.s32.totalorder %s16, 1
    %p51 = por %p49, %p50
    %p53 = scmp.ne.s32.totalorder %s36, %s52
    %p54 = scmp.eq.s32.totalorder %s16, 0
    %p55 = por %p53, %p54
    %s56 = ssub.s32 %s17, %s29
    %s57 = ssub.s32 %s18, %s25
    %s58 = sor.u32 %s56, %s57
    %p59 = scmp.eq.s32.totalorder %s58, 0
    %s61 = sadd.s32 %s60, 1
    %s62 = scalar_select %p59, %s60, %s61
    %p65 = pneg %p59
    %p66 = scmp.eq.s32.totalorder %s10, 1
    %p67 = por %p65, %p66
    %p68 = scmp.ne.s32.totalorder %s60, %s63
    %p69 = scmp.eq.s32.totalorder %s10, 0
    %p70 = por %p68, %p69
    %p71 = scmp.ne.s32.totalorder %s60, %s63
    %p72 = scmp.eq.s32.totalorder %s15, 1
    %p73 = por %p71, %p72
    %p74 = scmp.ne.s32.totalorder %s63, %s64
    %p75 = scmp.eq.s32.totalorder %s15, 0
    %p76 = por %p74, %p75
    %p77 = scmp.ne.s32.totalorder %s63, %s64
    %p78 = scmp.eq.s32.totalorder %s16, 1
    %p79 = por %p77, %p78
    %p81 = scmp.ne.s32.totalorder %s64, %s80
    %p82 = scmp.eq.s32.totalorder %s16, 0
    %p83 = por %p81, %p82
    %s85 = sadd.s32 %s84, 1
    %p88 = scmp.eq.s32.totalorder %s10, 1
    %p89 = scmp.ne.s32.totalorder %s84, %s86
    %p90 = scmp.eq.s32.totalorder %s10, 0
    %p91 = por %p89, %p90
    %p92 = scmp.ne.s32.totalorder %s84, %s86
    %p93 = scmp.eq.s32.totalorder %s15, 1
    %p94 = por %p92, %p93
    %p95 = scmp.ne.s32.totalorder %s86, %s87
    %p96 = scmp.eq.s32.totalorder %s15, 0
    %p97 = por %p95, %p96
    %p98 = scmp.ne.s32.totalorder %s86, %s87
    %p99 = scmp.eq.s32.totalorder %s16, 1
    %p100 = por %p98, %p99
    %p102 = scmp.ne.s32.totalorder %s87, %s101
    %p103 = scmp.eq.s32.totalorder %s16, 0
    %p104 = por %p102, %p103
    %s106 = sadd.s32 %s105, 1
    %p109 = scmp.eq.s32.totalorder %s10, 1
    %p110 = scmp.ne.s32.totalorder %s105, %s107
    %p111 = scmp.eq.s32.totalorder %s10, 0
    %p112 = por %p110, %p111
    %p113 = scmp.ne.s32.totalorder %s105, %s107
    %p114 = scmp.eq.s32.totalorder %s15, 1
    %p115 = por %p113, %p114
    %p116 = scmp.ne.s32.totalorder %s107, %s108
    %p117 = scmp.eq.s32.totalorder %s15, 0
    %p118 = por %p116, %p117
    %p119 = scmp.ne.s32.totalorder %s107, %s108
    %p120 = scmp.eq.s32.totalorder %s16, 1
    %p121 = por %p119, %p120
    %p123 = scmp.ne.s32.totalorder %s108, %s122
    %p124 = scmp.eq.s32.totalorder %s16, 0
    %p125 = por %p123, %p124
    %s126 = ssub.s32 %s17, %s29
    %s127 = ssub.s32 %s18, %s25
    %s128 = sor.u32 %s126, %s127
    %p129 = scmp.eq.s32.totalorder %s128, 0
    %s131 = sadd.s32 %s130, 1
    %s132 = scalar_select %p129, %s130, %s131
    %p135 = pneg %p129
    %p136 = scmp.eq.s32.totalorder %s10, 1
    %p137 = por %p135, %p136
    %p138 = scmp.ne.s32.totalorder %s130, %s133
    %p139 = scmp.eq.s32.totalorder %s10, 0
    %p140 = por %p138, %p139
    %p141 = scmp.ne.s32.totalorder %s130, %s133
    %p142 = scmp.eq.s32.totalorder %s15, 1
    %p143 = por %p141, %p142
    %p144 = scmp.ne.s32.totalorder %s133, %s134
    %p145 = scmp.eq.s32.totalorder %s15, 0
    %p146 = por %p144, %p145
    %p147 = scmp.ne.s32.totalorder %s133, %s134
    %p148 = scmp.eq.s32.totalorder %s16, 1
    %p149 = por %p147, %p148
    %p151 = scmp.ne.s32.totalorder %s134, %s150
    %p152 = scmp.eq.s32.totalorder %s16, 0
    %p153 = por %p151, %p152
    %p154 = scmp.le.s32.totalorder 1, %s10
    %p155 = scmp.lt.s32.totalorder %s10, 3
    %p156 = pnand %p154, %p155
    %p157 = pneg %p156
    // Predicated region
    $region9: #{tpu_custom_call.1} parent=5 // pred_check
      _
    $region10: #{tpu_custom_call.1} parent=5 // pred_check_branch
      %159 = sbr.rel (%p156) target = $region12
    $region11: #{tpu_custom_call.1} parent=5 // pred_region
      %s160 = ssub.s32 %s10, 1
      // Predicated region
      $region13: #{tpu_custom_call.1} parent=11 // pred_check
        %p161 = pneg %p97
      $region14: #{tpu_custom_call.1} parent=11 // pred_check_branch
        %163 = sbr.rel (%p161) target = $region16
      $region15: #{tpu_custom_call.1} parent=11 // pred_region
        _
      $region16: #{tpu_custom_call.1} parent=11 // pred_fallthru
        _
      // Predicated region
      $region17: #{tpu_custom_call.1} parent=11 // pred_check
        %p164 = pneg %p118
      $region18: #{tpu_custom_call.1} parent=11 // pred_check_branch
        %166 = sbr.rel (%p164) target = $region20
      $region19: #{tpu_custom_call.1} parent=11 // pred_region
        _
      $region20: #{tpu_custom_call.1} parent=11 // pred_fallthru
        _
    $region12: #{tpu_custom_call.1} parent=5 // pred_fallthru
      _
    %p167 = scmp.lt.s32.totalorder %s10, 2
    // Predicated region
    $region21: #{tpu_custom_call.1} parent=5 // pred_check
      %p168 = pneg %p167
    $region22: #{tpu_custom_call.1} parent=5 // pred_check_branch
      %170 = sbr.rel (%p168) target = $region24
    $region23: #{tpu_custom_call.1} parent=5 // pred_region
      // Predicated region
      $region25: #{tpu_custom_call.1} parent=23 // pred_check
        %p171 = pneg %p42
      $region26: #{tpu_custom_call.1} parent=23 // pred_check_branch
        %173 = sbr.rel (%p171) target = $region28
      $region27: #{tpu_custom_call.1} parent=23 // pred_region
        %p174 = scmp.lt.s32.totalorder %s17, 1
        %s175 = scalar_select %p174, %s17, 1
        %s176 = smul.addr %s175, 16
        %s177 = smul.addr %s176, 8
        %s178 = scalar_lea.vmem %s0, %s177
      $region28: #{tpu_custom_call.1} parent=23 // pred_fallthru
        _
      // Predicated region
      $region29: #{tpu_custom_call.1} parent=23 // pred_check
        %p179 = pneg %p70
      $region30: #{tpu_custom_call.1} parent=23 // pred_check_branch
        %181 = sbr.rel (%p179) target = $region32
      $region31: #{tpu_custom_call.1} parent=23 // pred_region
        %s182 = smul.u32 16, %s18
        %p183 = scmp.lt.s32.totalorder %s17, 1
        %s184 = scalar_select %p183, %s17, 1
        %p185 = scmp.lt.s32.totalorder %s182, 15
        %s186 = scalar_select %p185, %s182, 15
        %s187 = smul.addr %s184, 16
        %s188 = sadd.s32 %s186, %s187
        %s189 = smul.addr %s188, 8
        %s190 = scalar_lea.vmem %s1, %s189
        %s191 = smul.u32 16, %s18
      $region32: #{tpu_custom_call.1} parent=23 // pred_fallthru
        _
    $region24: #{tpu_custom_call.1} parent=5 // pred_fallthru
      _
    %p192 = scmp.le.s32.totalorder 1, %s10
    %p193 = scmp.lt.s32.totalorder %s10, 3
    %p194 = pnand %p192, %p193
    %p195 = pneg %p194
    // Predicated region
    $region33: #{tpu_custom_call.1} parent=5 // pred_check
      _
    $region34: #{tpu_custom_call.1} parent=5 // pred_check_branch
      %197 = sbr.rel (%p194) target = $region36
    $region35: #{tpu_custom_call.1} parent=5 // pred_region
      %s198 = ssub.s32 %s10, 1
      %p199 = scmp.lt.s32.totalorder %s19, 1
      %s200 = scalar_select %p199, %s19, 1
      %s201 = smul.addr %s200, 16
      %s202 = smul.addr %s201, 8
      %s203 = scalar_lea.vmem %s0, %s202
      %p204 = pneg %p48
      %p205 = pneg %p45
      %s206 = smul.u32 16, %s20
      %p207 = scmp.lt.s32.totalorder %s19, 1
      %s208 = scalar_select %p207, %s19, 1
      %p209 = scmp.lt.s32.totalorder %s206, 15
      %s210 = scalar_select %p209, %s206, 15
      %s211 = smul.addr %s208, 16
      %s212 = sadd.s32 %s210, %s211
      %s213 = smul.addr %s212, 8
      %s214 = scalar_lea.vmem %s1, %s213
      %p215 = pneg %p76
      %p216 = pneg %p73
      %p217 = pneg %p97
      %p218 = pneg %p94
      %p219 = pneg %p118
      %p220 = pneg %p115
      %p221 = pneg %p146
      %p222 = pneg %p143
      %s223 = smul.u32 16, %s20
      %p224 = scmp.lt.s32.totalorder %s19, 1
      %s225 = scalar_select %p224, %s19, 1
      %p226 = scmp.lt.s32.totalorder %s223, 15
      %s227 = scalar_select %p226, %s223, 15
      %s228 = smul.addr %s225, 16
      %s229 = sadd.s32 %s227, %s228
      %s230 = smul.addr %s229, 8
      %s231 = scalar_lea.vmem %s4, %s230
      %p232 = scmp.lt.s32.totalorder %s19, 1
      %s233 = scalar_select %p232, %s19, 1
      %s234 = smul.addr %s233, 16
      %s235 = smul.addr %s234, 8
      %s236 = scalar_lea.vmem %s0, %s235
      %s237 = smul.u32 16, %s20
      %p238 = scmp.lt.s32.totalorder %s19, 1
      %s239 = scalar_select %p238, %s19, 1
      %p240 = scmp.lt.s32.totalorder %s237, 15
      %s241 = scalar_select %p240, %s237, 15
      %s242 = smul.addr %s239, 16
      %s243 = sadd.s32 %s241, %s242
      %s244 = smul.addr %s243, 8
      %s245 = scalar_lea.vmem %s1, %s244
      %s246 = smul.u32 16, %s20
      %s247 = smul.u32 16, %s20
      %p248 = scmp.lt.s32.totalorder %s19, 1
      %s249 = scalar_select %p248, %s19, 1
      %p250 = scmp.lt.s32.totalorder %s247, 15
      %s251 = scalar_select %p250, %s247, 15
      %s252 = smul.addr %s249, 16
      %s253 = sadd.s32 %s251, %s252
      %s254 = smul.addr %s253, 8
      %s255 = scalar_lea.vmem %s4, %s254
      %s256 = smul.u32 16, %s20
      %v257 = vld [vmem:[%s245] sm:$0xff]
      %v258 = vld [vmem:[%s245 + $0x8] sm:$0xff]
      %v259 = vld [vmem:[%s245 + $0x10] sm:$0xff]
      %v260 = vld [vmem:[%s245 + $0x18] sm:$0xff]
      %v261 = vld [vmem:[%s245 + $0x20] sm:$0xff]
      %v262 = vld [vmem:[%s245 + $0x28] sm:$0xff]
      %v263 = vld [vmem:[%s245 + $0x30] sm:$0xff]
      %v264 = vld [vmem:[%s245 + $0x38] sm:$0xff]
      %v265 = vld [vmem:[%s245 + $0x40] sm:$0xff]
      %v266 = vld [vmem:[%s245 + $0x48] sm:$0xff]
      %v267 = vld [vmem:[%s245 + $0x50] sm:$0xff]
      %v268 = vld [vmem:[%s245 + $0x58] sm:$0xff]
      %v269 = vld [vmem:[%s245 + $0x60] sm:$0xff]
      %v270 = vld [vmem:[%s245 + $0x68] sm:$0xff]
      %v271 = vld [vmem:[%s245 + $0x70] sm:$0xff]
      %v272 = vld [vmem:[%s245 + $0x78] sm:$0xff]
      %v273 = vld [vmem:[%s236] sm:$0xff]
      %v274 = vld [vmem:[%s236 + $0x8] sm:$0xff]
      %v275 = vld [vmem:[%s236 + $0x10] sm:$0xff]
      %v276 = vld [vmem:[%s236 + $0x18] sm:$0xff]
      %v277 = vld [vmem:[%s236 + $0x20] sm:$0xff]
      %v278 = vld [vmem:[%s236 + $0x28] sm:$0xff]
      %v279 = vld [vmem:[%s236 + $0x30] sm:$0xff]
      %v280 = vld [vmem:[%s236 + $0x38] sm:$0xff]
      %v281 = vld [vmem:[%s236 + $0x40] sm:$0xff]
      %v282 = vld [vmem:[%s236 + $0x48] sm:$0xff]
      %v283 = vld [vmem:[%s236 + $0x50] sm:$0xff]
      %v284 = vld [vmem:[%s236 + $0x58] sm:$0xff]
      %v285 = vld [vmem:[%s236 + $0x60] sm:$0xff]
      %v286 = vld [vmem:[%s236 + $0x68] sm:$0xff]
      %v287 = vld [vmem:[%s236 + $0x70] sm:$0xff]
      %v288 = vld [vmem:[%s236 + $0x78] sm:$0xff]
      %289 = vmatprep.subr.mxu0 0.0
      %290 = vmatpush1.msra.mxu0 %v273
      %291 = vmatprep.subr.mxu0 0.0
      %292 = vmatpush1.msra.mxu0 %v274
      %293 = vmatprep.subr.mxu0 0.0
      %294 = vmatpush1.msra.mxu0 %v275
      %295 = vmatprep.subr.mxu0 0.0
      %296 = vmatpush1.msra.mxu0 %v276
      %297 = vmatprep.subr.mxu0 0.0
      %298 = vmatpush1.msra.mxu0 %v277
      %299 = vmatprep.subr.mxu0 0.0
      %300 = vmatpush1.msra.mxu0 %v278
      %301 = vmatprep.subr.mxu0 0.0
      %302 = vmatpush1.msra.mxu0 %v279
      %303 = vmatprep.subr.mxu0 0.0
      %304 = vmatpush1.msra.mxu0 %v280
      %305 = vmatprep.subr.mxu0 0.0
      %306 = vmatpush1.msra.mxu0 %v281
      %307 = vmatprep.subr.mxu0 0.0
      %308 = vmatpush1.msra.mxu0 %v282
      %309 = vmatprep.subr.mxu0 0.0
      %310 = vmatpush1.msra.mxu0 %v283
      %311 = vmatprep.subr.mxu0 0.0
      %312 = vmatpush1.msra.mxu0 %v284
      %313 = vmatprep.subr.mxu0 0.0
      %314 = vmatpush1.msra.mxu0 %v285
      %315 = vmatprep.subr.mxu0 0.0
      %316 = vmatpush1.msra.mxu0 %v286
      %317 = vmatprep.subr.mxu0 0.0
      %318 = vmatpush1.msra.mxu0 %v287
      %319 = vmatprep.subr.mxu0 0.0
      %320 = vmatpush1.msra.mxu0 %v288
      %321 = vmatprep.subr.mxu0 0.0
      %322 = vmatpush1.msra.mxu0 0.0
      %323 = vmatprep.subr.mxu0 0.0
      %324 = vmatpush1.msra.mxu0 0.0
      %325 = vmatprep.subr.mxu0 0.0
      %326 = vmatpush1.msra.mxu0 0.0
      %327 = vmatprep.subr.mxu0 0.0
      %328 = vmatpush1.msra.mxu0 0.0
      %329 = vmatprep.subr.mxu0 0.0
      %330 = vmatpush1.msra.mxu0 0.0
      %331 = vmatprep.subr.mxu0 0.0
      %332 = vmatpush1.msra.mxu0 0.0
      %333 = vmatprep.subr.mxu0 0.0
      %334 = vmatpush1.msra.mxu0 0.0
      %335 = vmatprep.subr.mxu0 0.0
      %336 = vmatpush1.msra.mxu0 0.0
      %337 = vmatprep.subr.mxu0 0.0
      %338 = vmatpush1.msra.mxu0 0.0
      %339 = vmatprep.subr.mxu0 0.0
      %340 = vmatpush1.msra.mxu0 0.0
      %341 = vmatprep.subr.mxu0 0.0
      %342 = vmatpush1.msra.mxu0 0.0
      %343 = vmatprep.subr.mxu0 0.0
      %344 = vmatpush1.msra.mxu0 0.0
      %345 = vmatprep.subr.mxu0 0.0
      %346 = vmatpush1.msra.mxu0 0.0
      %347 = vmatprep.subr.mxu0 0.0
      %348 = vmatpush1.msra.mxu0 0.0
      %349 = vmatprep.subr.mxu0 0.0
      %350 = vmatpush1.msra.mxu0 0.0
      %351 = vmatprep.subr.mxu0 0.0
      %352 = vmatpush1.msra.mxu0 0.0
      %353 = vmatprep.mubr.f32.mxu0 0.0
      %354 = vmatmul.mubr.f32.gmra.mrb[0].mxu0 %v257
      %v355 = vpop.f32.mrb[0].mxu0
      %v356 = vadd.f32 0.0, %v355
      %v357 = vpop.f32.mrb[0].mxu0
      %358 = vmatprep.mubr.f32.mxu0 0.0
      %359 = vmatmul.mubr.f32.gmra.mrb[0].mxu0 %v258
      %v360 = vpop.f32.mrb[0].mxu0
      %v361 = vadd.f32 0.0, %v360
      %v362 = vpop.f32.mrb[0].mxu0
      %363 = vmatprep.mubr.f32.mxu0 0.0
      %364 = vmatmul.mubr.f32.gmra.mrb[0].mxu0 %v259
      %v365 = vpop.f32.mrb[0].mxu0
      %v366 = vadd.f32 0.0, %v365
      %v367 = vpop.f32.mrb[0].mxu0
      %368 = vmatprep.mubr.f32.mxu0 0.0
      %369 = vmatmul.mubr.f32.gmra.mrb[0].mxu0 %v260
      %v370 = vpop.f32.mrb[0].mxu0
      %v371 = vadd.f32 0.0, %v370
      %v372 = vpop.f32.mrb[0].mxu0
      %373 = vmatprep.mubr.f32.mxu0 0.0
      %374 = vmatmul.mubr.f32.gmra.mrb[0].mxu0 %v261
      %v375 = vpop.f32.mrb[0].mxu0
      %v376 = vadd.f32 0.0, %v375
      %v377 = vpop.f32.mrb[0].mxu0
      %378 = vmatprep.mubr.f32.mxu0 0.0
      %379 = vmatmul.mubr.f32.gmra.mrb[0].mxu0 %v262
      %v380 = vpop.f32.mrb[0].mxu0
      %v381 = vadd.f32 0.0, %v380
      %v382 = vpop.f32.mrb[0].mxu0
      %383 = vmatprep.mubr.f32.mxu0 0.0
      %384 = vmatmul.mubr.f32.gmra.mrb[0].mxu0 %v263
      %v385 = vpop.f32.mrb[0].mxu0
      %v386 = vadd.f32 0.0, %v385
      %v387 = vpop.f32.mrb[0].mxu0
      %388 = vmatprep.mubr.f32.mxu0 0.0
      %389 = vmatmul.mubr.f32.gmra.mrb[0].mxu0 %v264
      %v390 = vpop.f32.mrb[0].mxu0
      %v391 = vadd.f32 0.0, %v390
      %v392 = vpop.f32.mrb[0].mxu0
      %393 = vmatprep.mubr.f32.mxu0 0.0
      %394 = vmatmul.mubr.f32.gmra.mrb[0].mxu0 %v265
      %v395 = vpop.f32.mrb[0].mxu0
      %v396 = vadd.f32 0.0, %v395
      %v397 = vpop.f32.mrb[0].mxu0
      %398 = vmatprep.mubr.f32.mxu0 0.0
      %399 = vmatmul.mubr.f32.gmra.mrb[0].mxu0 %v266
      %v400 = vpop.f32.mrb[0].mxu0
      %v401 = vadd.f32 0.0, %v400
      %v402 = vpop.f32.mrb[0].mxu0
      %403 = vmatprep.mubr.f32.mxu0 0.0
      %404 = vmatmul.mubr.f32.gmra.mrb[0].mxu0 %v267
      %v405 = vpop.f32.mrb[0].mxu0
      %v406 = vadd.f32 0.0, %v405
      %v407 = vpop.f32.mrb[0].mxu0
      %408 = vmatprep.mubr.f32.mxu0 0.0
      %409 = vmatmul.mubr.f32.gmra.mrb[0].mxu0 %v268
      %v410 = vpop.f32.mrb[0].mxu0
      %v411 = vadd.f32 0.0, %v410
      %v412 = vpop.f32.mrb[0].mxu0
      %413 = vmatprep.mubr.f32.mxu0 0.0
      %414 = vmatmul.mubr.f32.gmra.mrb[0].mxu0 %v269
      %v415 = vpop.f32.mrb[0].mxu0
      %v416 = vadd.f32 0.0, %v415
      %v417 = vpop.f32.mrb[0].mxu0
      %418 = vmatprep.mubr.f32.mxu0 0.0
      %419 = vmatmul.mubr.f32.gmra.mrb[0].mxu0 %v270
      %v420 = vpop.f32.mrb[0].mxu0
      %v421 = vadd.f32 0.0, %v420
      %v422 = vpop.f32.mrb[0].mxu0
      %423 = vmatprep.mubr.f32.mxu0 0.0
      %424 = vmatmul.mubr.f32.gmra.mrb[0].mxu0 %v271
      %v425 = vpop.f32.mrb[0].mxu0
      %v426 = vadd.f32 0.0, %v425
      %v427 = vpop.f32.mrb[0].mxu0
      %428 = vmatprep.mubr.f32.mxu0 0.0
      %429 = vmatmul.mubr.f32.gmra.mrb[0].mxu0 %v272
      %v430 = vpop.f32.mrb[0].mxu0
      %v431 = vadd.f32 0.0, %v430
      %v432 = vpop.f32.mrb[0].mxu0
      %433 = vdwg.mxu0
      %v434 = vld [vmem:[%s2] sm:$0xff]
      %v435 = vld [vmem:[%s2 + $0x8] sm:$0xff]
      %v436 = vld [vmem:[%s2 + $0x10] sm:$0xff]
      %v437 = vld [vmem:[%s2 + $0x18] sm:$0xff]
      %v438 = vld [vmem:[%s3] sm:$0x1]
      %v440 = vlaneseq
      %v441 = vshrl.u32 %v440, 7
      %v442 = vsub.s32 0, %v441
      %v443 = vrot.slane %v438, %v442
      %vm445 = vcmask 261120
      %v447 = vsel %vm445, %v356, 0
      %v450 = vsel %vm445, %v361, 0
      %v453 = vsel %vm445, %v366, 0
      %v456 = vsel %vm445, %v371, 0
      %v459 = vsel %vm445, %v376, 0
      %v462 = vsel %vm445, %v381, 0
      %v465 = vsel %vm445, %v386, 0
      %v468 = vsel %vm445, %v391, 0
      %v471 = vsel %vm445, %v396, 0
      %v474 = vsel %vm445, %v401, 0
      %v477 = vsel %vm445, %v406, 0
      %v480 = vsel %vm445, %v411, 0
      %v483 = vsel %vm445, %v416, 0
      %v486 = vsel %vm445, %v421, 0
      %v489 = vsel %vm445, %v426, 0
      %v492 = vsel %vm445, %v431, 0
      %494 = vmatprep.subr.mxu0 0.0
      %495 = vmatpush1.msra.mxu0 %v434
      %496 = vmatprep.subr.mxu0 0.0
      %497 = vmatpush1.msra.mxu0 %v435
      %498 = vmatprep.subr.mxu0 0.0
      %499 = vmatpush1.msra.mxu0 %v436
      %500 = vmatprep.subr.mxu0 0.0
      %501 = vmatpush1.msra.mxu0 %v437
      %502 = vmatprep.subr.mxu0 0.0
      %503 = vmatpush1.msra.mxu0 0.0
      %504 = vmatprep.subr.mxu0 0.0
      %505 = vmatpush1.msra.mxu0 0.0
      %506 = vmatprep.subr.mxu0 0.0
      %507 = vmatpush1.msra.mxu0 0.0
      %508 = vmatprep.subr.mxu0 0.0
      %509 = vmatpush1.msra.mxu0 0.0
      %510 = vmatprep.subr.mxu0 0.0
      %511 = vmatpush1.msra.mxu0 0.0
      %512 = vmatprep.subr.mxu0 0.0
      %513 = vmatpush1.msra.mxu0 0.0
      %514 = vmatprep.subr.mxu0 0.0
      %515 = vmatpush1.msra.mxu0 0.0
      %516 = vmatprep.subr.mxu0 0.0
      %517 = vmatpush1.msra.mxu0 0.0
      %518 = vmatprep.subr.mxu0 0.0
      %519 = vmatpush1.msra.mxu0 0.0
      %520 = vmatprep.subr.mxu0 0.0
      %521 = vmatpush1.msra.mxu0 0.0
      %522 = vmatprep.subr.mxu0 0.0
      %523 = vmatpush1.msra.mxu0 0.0
      %524 = vmatprep.subr.mxu0 0.0
      %525 = vmatpush1.msra.mxu0 0.0
      %526 = vmatprep.subr.mxu0 0.0
      %527 = vmatpush1.msra.mxu0 0.0
      %528 = vmatprep.subr.mxu0 0.0
      %529 = vmatpush1.msra.mxu0 0.0
      %530 = vmatprep.subr.mxu0 0.0
      %531 = vmatpush1.msra.mxu0 0.0
      %532 = vmatprep.subr.mxu0 0.0
      %533 = vmatpush1.msra.mxu0 0.0
      %534 = vmatprep.subr.mxu0 0.0
      %535 = vmatpush1.msra.mxu0 0.0
      %536 = vmatprep.subr.mxu0 0.0
      %537 = vmatpush1.msra.mxu0 0.0
      %538 = vmatprep.subr.mxu0 0.0
      %539 = vmatpush1.msra.mxu0 0.0
      %540 = vmatprep.subr.mxu0 0.0
      %541 = vmatpush1.msra.mxu0 0.0
      %542 = vmatprep.subr.mxu0 0.0
      %543 = vmatpush1.msra.mxu0 0.0
      %544 = vmatprep.subr.mxu0 0.0
      %545 = vmatpush1.msra.mxu0 0.0
      %546 = vmatprep.subr.mxu0 0.0
      %547 = vmatpush1.msra.mxu0 0.0
      %548 = vmatprep.subr.mxu0 0.0
      %549 = vmatpush1.msra.mxu0 0.0
      %550 = vmatprep.subr.mxu0 0.0
      %551 = vmatpush1.msra.mxu0 0.0
      %552 = vmatprep.subr.mxu0 0.0
      %553 = vmatpush1.msra.mxu0 0.0
      %554 = vmatprep.subr.mxu0 0.0
      %555 = vmatpush1.msra.mxu0 0.0
      %556 = vmatprep.subr.mxu0 0.0
      %557 = vmatpush1.msra.mxu0 0.0
      %558 = vmatprep.mubr.f32.mxu0 0.0
      %559 = vmatmul.mubr.f32.gmra.mrb[0].mxu0 %v447
      %v560 = vpop.f32.mrb[0].mxu0
      %v561 = vadd.f32 %v443, %v560
      %v562 = vpop.f32.mrb[0].mxu0
      %563 = vmatprep.mubr.f32.mxu0 0.0
      %564 = vmatmul.mubr.f32.gmra.mrb[0].mxu0 %v450
      %v565 = vpop.f32.mrb[0].mxu0
      %v566 = vadd.f32 %v443, %v565
      %v567 = vpop.f32.mrb[0].mxu0
      %568 = vmatprep.mubr.f32.mxu0 0.0
      %569 = vmatmul.mubr.f32.gmra.mrb[0].mxu0 %v453
      %v570 = vpop.f32.mrb[0].mxu0
      %v571 = vadd.f32 %v443, %v570
      %v572 = vpop.f32.mrb[0].mxu0
      %573 = vmatprep.mubr.f32.mxu0 0.0
      %574 = vmatmul.mubr.f32.gmra.mrb[0].mxu0 %v456
      %v575 = vpop.f32.mrb[0].mxu0
      %v576 = vadd.f32 %v443, %v575
      %v577 = vpop.f32.mrb[0].mxu0
      %578 = vmatprep.mubr.f32.mxu0 0.0
      %579 = vmatmul.mubr.f32.gmra.mrb[0].mxu0 %v459
      %v580 = vpop.f32.mrb[0].mxu0
      %v581 = vadd.f32 %v443, %v580
      %v582 = vpop.f32.mrb[0].mxu0
      %583 = vmatprep.mubr.f32.mxu0 0.0
      %584 = vmatmul.mubr.f32.gmra.mrb[0].mxu0 %v462
      %v585 = vpop.f32.mrb[0].mxu0
      %v586 = vadd.f32 %v443, %v585
      %v587 = vpop.f32.mrb[0].mxu0
      %588 = vmatprep.mubr.f32.mxu0 0.0
      %589 = vmatmul.mubr.f32.gmra.mrb[0].mxu0 %v465
      %v590 = vpop.f32.mrb[0].mxu0
      %v591 = vadd.f32 %v443, %v590
      %v592 = vpop.f32.mrb[0].mxu0
      %593 = vmatprep.mubr.f32.mxu0 0.0
      %594 = vmatmul.mubr.f32.gmra.mrb[0].mxu0 %v468
      %v595 = vpop.f32.mrb[0].mxu0
      %v596 = vadd.f32 %v443, %v595
      %v597 = vpop.f32.mrb[0].mxu0
      %598 = vmatprep.mubr.f32.mxu0 0.0
      %599 = vmatmul.mubr.f32.gmra.mrb[0].mxu0 %v471
      %v600 = vpop.f32.mrb[0].mxu0
      %v601 = vadd.f32 %v443, %v600
      %v602 = vpop.f32.mrb[0].mxu0
      %603 = vmatprep.mubr.f32.mxu0 0.0
      %604 = vmatmul.mubr.f32.gmra.mrb[0].mxu0 %v474
      %v605 = vpop.f32.mrb[0].mxu0
      %v606 = vadd.f32 %v443, %v605
      %v607 = vpop.f32.mrb[0].mxu0
      %608 = vmatprep.mubr.f32.mxu0 0.0
      %609 = vmatmul.mubr.f32.gmra.mrb[0].mxu0 %v477
      %v610 = vpop.f32.mrb[0].mxu0
      %v611 = vadd.f32 %v443, %v610
      %v612 = vpop.f32.mrb[0].mxu0
      %613 = vmatprep.mubr.f32.mxu0 0.0
      %614 = vmatmul.mubr.f32.gmra.mrb[0].mxu0 %v480
      %v615 = vpop.f32.mrb[0].mxu0
      %v616 = vadd.f32 %v443, %v615
      %v617 = vpop.f32.mrb[0].mxu0
      %618 = vmatprep.mubr.f32.mxu0 0.0
      %619 = vmatmul.mubr.f32.gmra.mrb[0].mxu0 %v483
      %v620 = vpop.f32.mrb[0].mxu0
      %v621 = vadd.f32 %v443, %v620
      %v622 = vpop.f32.mrb[0].mxu0
      %623 = vmatprep.mubr.f32.mxu0 0.0
      %624 = vmatmul.mubr.f32.gmra.mrb[0].mxu0 %v486
      %v625 = vpop.f32.mrb[0].mxu0
      %v626 = vadd.f32 %v443, %v625
      %v627 = vpop.f32.mrb[0].mxu0
      %628 = vmatprep.mubr.f32.mxu0 0.0
      %629 = vmatmul.mubr.f32.gmra.mrb[0].mxu0 %v489
      %v630 = vpop.f32.mrb[0].mxu0
      %v631 = vadd.f32 %v443, %v630
      %v632 = vpop.f32.mrb[0].mxu0
      %633 = vmatprep.mubr.f32.mxu0 0.0
      %634 = vmatmul.mubr.f32.gmra.mrb[0].mxu0 %v492
      %v635 = vpop.f32.mrb[0].mxu0
      %v636 = vadd.f32 %v443, %v635
      %v637 = vpop.f32.mrb[0].mxu0
      %638 = vdwg.mxu0
      %v639 = vmax.f32 %v561, 0.0
      %v640 = vmax.f32 %v566, 0.0
      %v641 = vmax.f32 %v571, 0.0
      %v642 = vmax.f32 %v576, 0.0
      %v643 = vmax.f32 %v581, 0.0
      %v644 = vmax.f32 %v586, 0.0
      %v645 = vmax.f32 %v591, 0.0
      %v646 = vmax.f32 %v596, 0.0
      %v647 = vmax.f32 %v601, 0.0
      %v648 = vmax.f32 %v606, 0.0
      %v649 = vmax.f32 %v611, 0.0
      %v650 = vmax.f32 %v616, 0.0
      %v651 = vmax.f32 %v621, 0.0
      %v652 = vmax.f32 %v626, 0.0
      %v653 = vmax.f32 %v631, 0.0
      %v654 = vmax.f32 %v636, 0.0
      %655 = vst.msk [vmem:[%s255] sm:$0xff] %vm445, %v639
      %656 = vst.msk [vmem:[%s255 + $0x8] sm:$0xff] %vm445, %v640
      %657 = vst.msk [vmem:[%s255 + $0x10] sm:$0xff] %vm445, %v641
      %658 = vst.msk [vmem:[%s255 + $0x18] sm:$0xff] %vm445, %v642
      %659 = vst.msk [vmem:[%s255 + $0x20] sm:$0xff] %vm445, %v643
      %660 = vst.msk [vmem:[%s255 + $0x28] sm:$0xff] %vm445, %v644
      %661 = vst.msk [vmem:[%s255 + $0x30] sm:$0xff] %vm445, %v645
      %662 = vst.msk [vmem:[%s255 + $0x38] sm:$0xff] %vm445, %v646
      %663 = vst.msk [vmem:[%s255 + $0x40] sm:$0xff] %vm445, %v647
      %664 = vst.msk [vmem:[%s255 + $0x48] sm:$0xff] %vm445, %v648
      %665 = vst.msk [vmem:[%s255 + $0x50] sm:$0xff] %vm445, %v649
      %666 = vst.msk [vmem:[%s255 + $0x58] sm:$0xff] %vm445, %v650
      %667 = vst.msk [vmem:[%s255 + $0x60] sm:$0xff] %vm445, %v651
      %668 = vst.msk [vmem:[%s255 + $0x68] sm:$0xff] %vm445, %v652
      %669 = vst.msk [vmem:[%s255 + $0x70] sm:$0xff] %vm445, %v653
      %670 = vst.msk [vmem:[%s255 + $0x78] sm:$0xff] %vm445, %v654
      %s671 = smul.u32 16, %s20
      %p672 = scmp.lt.s32.totalorder %s19, 1
      %s673 = scalar_select %p672, %s19, 1
      %p674 = scmp.lt.s32.totalorder %s671, 15
      %s675 = scalar_select %p674, %s671, 15
      %s676 = smul.addr %s673, 16
      %s677 = sadd.s32 %s675, %s676
      %s678 = smul.addr %s677, 8
      %s679 = scalar_lea.vmem %s4, %s678
      // Predicated region
      $region37: #{tpu_custom_call.1} parent=35 // pred_check
        %p680 = pneg %p143
      $region38: #{tpu_custom_call.1} parent=35 // pred_check_branch
        %682 = sbr.rel (%p680) target = $region40
      $region39: #{tpu_custom_call.1} parent=35 // pred_region
        %s683 = smul.u32 16, %s20
      $region40: #{tpu_custom_call.1} parent=35 // pred_fallthru
        _
    $region36: #{tpu_custom_call.1} parent=5 // pred_fallthru
      _
    %p684 = scmp.le.s32.totalorder 2, %s10
    // Predicated region
    $region41: #{tpu_custom_call.1} parent=5 // pred_check
      %p685 = pneg %p684
    $region42: #{tpu_custom_call.1} parent=5 // pred_check_branch
      %687 = sbr.rel (%p685) target = $region44
    $region43: #{tpu_custom_call.1} parent=5 // pred_region
      %s688 = ssub.s32 %s10, 2
      // Predicated region
      $region45: #{tpu_custom_call.1} parent=43 // pred_check
        %p689 = pneg %p149
      $region46: #{tpu_custom_call.1} parent=43 // pred_check_branch
        %691 = sbr.rel (%p689) target = $region48
      $region47: #{tpu_custom_call.1} parent=43 // pred_region
        %s692 = smul.u32 16, %s22
        %p693 = scmp.lt.s32.totalorder %s21, 1
        %s694 = scalar_select %p693, %s21, 1
        %p695 = scmp.lt.s32.totalorder %s692, 15
        %s696 = scalar_select %p695, %s692, 15
        %s697 = smul.addr %s694, 16
        %s698 = sadd.s32 %s696, %s697
        %s699 = smul.addr %s698, 8
        %s700 = scalar_lea.vmem %s4, %s699
      $region48: #{tpu_custom_call.1} parent=43 // pred_fallthru
        _
    $region44: #{tpu_custom_call.1} parent=5 // pred_fallthru
      _
  $region6: #{tpu_custom_call.1} parent=0 // loop_footer
    %s14 = sadd.s32 1, %s10
  $region7: #{tpu_custom_call.1} parent=0 // loop_footer_branch
    %9 = sbr.rel target = $region3
  $region8: #{tpu_custom_call.1} parent=0 // loop_exit
    _

</llo_original>
